<compile_context>
chip_gen: v5e
topology: v5e:2x2
jax: 0.10.0
libtpu: 0.0.40
codegen_flags: <defaults>
</compile_context>

<pallas_src>
import math
import functools

import jax
import jax.numpy as jnp
import numpy as np
from jax.experimental import pallas as pl
from jax.experimental.pallas import tpu as pltpu


# ----------------------------------------------------------------------------
# Pallas kernel: embedding folded into the input-gate slab + unrolled LSTM +
# single classifier matmul. One grid point, everything resident in VMEM.
# ----------------------------------------------------------------------------
def lstm_classifier_kernel(xcat_ref,    # (S*B, 3*C_in)  rows ordered t-major, then batch
                           wcomb_ref,   # (3*C_in, 4H)   conv taps folded into W_ih
                           posg_ref,    # (S*B, 4H)      pos@W_ih + b_ih + b_hh, per row
                           whh_ref,     # (H, 4H)        recurrent weights (pre-transposed)
                           wfc_ref,     # (S*H, NCP)     classifier, lane-padded
                           bfc_ref,     # (1, NCP)
                           out_ref,     # (B, NCP)
                           *, seq_len, batch, hidden):
    H = hidden

    # --- hoisted input-gate slab: ONE matmul for all timesteps + const bias table ---
    gx_all = (jnp.dot(xcat_ref[...], wcomb_ref[...],
                      preferred_element_type=jnp.float32)
              + posg_ref[...])                                    # (S*B, 4H)

    # recurrent weight loaded once; at H=32 it lives in a handful of vregs
    whh = whh_ref[...]                                            # (H, 4H)

    h = jnp.zeros((batch, H), jnp.float32)
    c = jnp.zeros((batch, H), jnp.float32)
    h_steps = []

    # --- fully unrolled recurrence: only h @ W_hh is on the serial path ---
    for t in range(seq_len):                                      # S is small & static
        gates = gx_all[t * batch:(t + 1) * batch, :] + jnp.dot(
            h, whh, preferred_element_type=jnp.float32)           # (B, 4H)
        # PyTorch gate order: i, f, g, o
        i_g = jax.nn.sigmoid(gates[:, 0 * H:1 * H])
        f_g = jax.nn.sigmoid(gates[:, 1 * H:2 * H])
        g_g = jnp.tanh(gates[:, 2 * H:3 * H])
        o_g = jax.nn.sigmoid(gates[:, 3 * H:4 * H])
        c = f_g * c + i_g * g_g
        h = o_g * jnp.tanh(c)
        h_steps.append(h)

    # --- Flatten (B, S, H) -> (B, S*H) == lane-concat of per-step h, then one matmul ---
    h_flat = jnp.concatenate(h_steps, axis=-1)                    # (B, S*H)
    out_ref[...] = (jnp.dot(h_flat, wfc_ref[...],
                            preferred_element_type=jnp.float32)
                    + bfc_ref[...])


# ----------------------------------------------------------------------------
# Wrapper: parameter folding / layout glue (pure JAX) + pallas_call
# ----------------------------------------------------------------------------
def model_forward(x_enc, params, num_class):
    # x_mark_enc / x_dec / x_mark_dec are unused by the PyTorch forward (x_mark=None).
    B, S, C_in = x_enc.shape
    H = params["w_hh"].shape[1]                    # d_model == hidden size
    NCP = ((num_class + 127) // 128) * 128         # lane-dense classifier output

    # circular Conv1d(k=3, padding=1) taps act on x[t-1], x[t], x[t+1]
    x32 = x_enc.astype(jnp.float32)
    xp = jnp.roll(x32, 1, axis=1)                  # x[t-1]  (circular)
    xn = jnp.roll(x32, -1, axis=1)                 # x[t+1]  (circular)
    x_cat = jnp.concatenate([xp, x32, xn], axis=-1)            # (B, S, 3*C_in)
    x_cat = jnp.transpose(x_cat, (1, 0, 2)).reshape(S * B, 3 * C_in)  # row = t*B + b

    conv_w = params["conv_w"]                       # (H, C_in, 3) PyTorch Conv1d weight
    w_taps = jnp.concatenate([conv_w[:, :, 0].T,    # (C_in, H) tap on x[t-1]
                              conv_w[:, :, 1].T,    # tap on x[t]
                              conv_w[:, :, 2].T],   # tap on x[t+1]
                             axis=0)                # (3*C_in, H)
    wih_t = params["w_ih"].T                        # (H, 4H)
    w_comb = w_taps @ wih_t                         # (3*C_in, 4H): conv + input proj fused

    # per-timestep constant gate bias: pos @ W_ih^T + b_ih + b_hh, replicated per batch row
    pos_gates = params["pos"] @ wih_t + (params["b_ih"] + params["b_hh"])[None, :]  # (S, 4H)
    posg = jnp.repeat(pos_gates, B, axis=0)         # (S*B, 4H), row = t*B + b

    whh_t = params["w_hh"].T                        # (H, 4H)

    wfc_t = params["fc_w"].T                        # (S*H, num_class)
    wfc_pad = jnp.zeros((S * H, NCP), jnp.float32).at[:, :num_class].set(wfc_t)
    bfc_pad = jnp.zeros((1, NCP), jnp.float32).at[0, :num_class].set(params["fc_b"])

    vmem = pl.BlockSpec(memory_space=pltpu.MemorySpace.VMEM)
    kernel = functools.partial(lstm_classifier_kernel,
                               seq_len=S, batch=B, hidden=H)
    out_pad = pl.pallas_call(
        kernel,
        out_shape=jax.ShapeDtypeStruct((B, NCP), jnp.float32),
        in_specs=[vmem] * 6,
        out_specs=vmem,
    )(x_cat, w_comb, posg, whh_t, wfc_pad, bfc_pad)
    return out_pad[:, :num_class]


# ----------------------------------------------------------------------------
# Pure-JAX reference (for correctness check)
# ----------------------------------------------------------------------------
def reference_forward(x_enc, params, num_class):
    B, S, C_in = x_enc.shape
    H = params["w_hh"].shape[1]
    W = params["conv_w"]
    xp = jnp.roll(x_enc, 1, axis=1)
    xn = jnp.roll(x_enc, -1, axis=1)
    emb = (jnp.einsum("bsc,hc->bsh", xp, W[:, :, 0])
           + jnp.einsum("bsc,hc->bsh", x_enc, W[:, :, 1])
           + jnp.einsum("bsc,hc->bsh", xn, W[:, :, 2])
           + params["pos"][None])
    b = params["b_ih"] + params["b_hh"]
    h = jnp.zeros((B, H), jnp.float32)
    c = jnp.zeros((B, H), jnp.float32)
    hs = []
    for t in range(S):
        g = emb[:, t, :] @ params["w_ih"].T + h @ params["w_hh"].T + b
        i_g = jax.nn.sigmoid(g[:, :H])
        f_g = jax.nn.sigmoid(g[:, H:2 * H])
        g_g = jnp.tanh(g[:, 2 * H:3 * H])
        o_g = jax.nn.sigmoid(g[:, 3 * H:])
        c = f_g * c + i_g * g_g
        h = o_g * jnp.tanh(c)
        hs.append(h)
    hall = jnp.stack(hs, axis=1)                    # (B, S, H)
    return hall.reshape(B, S * H) @ params["fc_w"].T + params["fc_b"]


# ----------------------------------------------------------------------------
# Deterministic synthetic parameters (shapes follow the PyTorch module)
# ----------------------------------------------------------------------------
def make_params(key, enc_in, d_model, seq_len, num_class):
    ks = jax.random.split(key, 7)
    H = d_model
    params = {
        "conv_w": jax.random.normal(ks[0], (H, enc_in, 3), jnp.float32)
                  * (1.0 / math.sqrt(enc_in * 3)),
        "w_ih": jax.random.normal(ks[1], (4 * H, H), jnp.float32) * (1.0 / math.sqrt(H)),
        "w_hh": jax.random.normal(ks[2], (4 * H, H), jnp.float32) * (1.0 / math.sqrt(H)),
        "b_ih": jax.random.uniform(ks[3], (4 * H,), jnp.float32, -0.1, 0.1),
        "b_hh": jax.random.uniform(ks[4], (4 * H,), jnp.float32, -0.1, 0.1),
        "fc_w": jax.random.normal(ks[5], (num_class, seq_len * H), jnp.float32)
                * (1.0 / math.sqrt(seq_len * H)),
        "fc_b": jax.random.uniform(ks[6], (num_class,), jnp.float32, -0.1, 0.1),
    }
    # fixed sinusoidal positional embedding (no parameters)
    position = jnp.arange(seq_len, dtype=jnp.float32)[:, None]
    div_term = jnp.exp(jnp.arange(0, d_model, 2, dtype=jnp.float32)
                       * (-math.log(10000.0) / d_model))
    pe = jnp.zeros((seq_len, d_model), jnp.float32)
    pe = pe.at[:, 0::2].set(jnp.sin(position * div_term))
    pe = pe.at[:, 1::2].set(jnp.cos(position * div_term))
    params["pos"] = pe
    return params
    # TODO(synk): nn.Dropout(0.1) inside DataEmbedding is identity in eval mode — omitted.


if __name__ == "__main__":
    # configs: enc_in=4, d_model=32, seq_len=8, num_class=5; batch=2
    B, S, C_IN, D_MODEL, NUM_CLASS = 2, 8, 4, 32, 5

    key = jax.random.PRNGKey(0)
    k_params, k_x = jax.random.split(key)
    params = make_params(k_params, C_IN, D_MODEL, S, NUM_CLASS)
    x_enc = jax.random.normal(k_x, (B, S, C_IN), jnp.float32)
    # unused by the forward pass (kept for interface parity with the PyTorch module)
    x_mark_enc = x_dec = x_mark_dec = None

    out = model_forward(x_enc, params, NUM_CLASS)
    out = jax.block_until_ready(out)

    with jax.default_matmul_precision("float32"):
        ref = jax.block_until_ready(reference_forward(x_enc, params, NUM_CLASS))

    np.testing.assert_allclose(np.asarray(out), np.asarray(ref), rtol=1e-2, atol=1e-2)
    print("KERNEL_OK")
</pallas_src>

<mosaic_0001>
module attributes {stable_mosaic.version = 11 : i64} {
  func.func @lstm_classifier_kernel(%arg0: memref<16x12xf32, #tpu.memory_space<vmem>>, %arg1: memref<12x128xf32, #tpu.memory_space<vmem>>, %arg2: memref<16x128xf32, #tpu.memory_space<vmem>>, %arg3: memref<32x128xf32, #tpu.memory_space<vmem>>, %arg4: memref<256x128xf32, #tpu.memory_space<vmem>>, %arg5: memref<1x128xf32, #tpu.memory_space<vmem>>, %arg6: memref<2x128xf32, #tpu.memory_space<vmem>>) attributes {dimension_semantics = [], scalar_prefetch = 0 : i64, scratch_operands = 0 : i64, tpu.core_type = #tpu.core_type<tc>} {
    %c0 = arith.constant 0 : index
    %c0_0 = arith.constant 0 : index
    %0 = vector.load %arg0[%c0, %c0_0] : memref<16x12xf32, #tpu.memory_space<vmem>>, vector<16x12xf32>
    %c0_1 = arith.constant 0 : index
    %c0_2 = arith.constant 0 : index
    %1 = vector.load %arg1[%c0_1, %c0_2] : memref<12x128xf32, #tpu.memory_space<vmem>>, vector<12x128xf32>
    %cst = arith.constant dense<0.000000e+00> : vector<16x128xf32>
    %2 = tpu.matmul %0, %1, %cst {dimension_numbers = #tpu.dot_dimension_numbers<[1], [0], [0], [1], [0, 0, 1, 1], [], []>} : vector<16x12xf32>, vector<12x128xf32>, vector<16x128xf32> -> vector<16x128xf32>
    %c0_3 = arith.constant 0 : index
    %c0_4 = arith.constant 0 : index
    %3 = vector.load %arg2[%c0_3, %c0_4] : memref<16x128xf32, #tpu.memory_space<vmem>>, vector<16x128xf32>
    %4 = arith.addf %2, %3 : vector<16x128xf32>
    %c0_5 = arith.constant 0 : index
    %c0_6 = arith.constant 0 : index
    %5 = vector.load %arg3[%c0_5, %c0_6] : memref<32x128xf32, #tpu.memory_space<vmem>>, vector<32x128xf32>
    %cst_7 = arith.constant 0.000000e+00 : f32
    %6 = vector.broadcast %cst_7 : f32 to vector<2x32xf32>
    %cst_8 = arith.constant 0.000000e+00 : f32
    %7 = vector.broadcast %cst_8 : f32 to vector<2x32xf32>
    %8 = vector.extract_strided_slice %4 {offsets = [0, 0], sizes = [2, 128], strides = [1, 1]} : vector<16x128xf32> to vector<2x128xf32>
    %cst_9 = arith.constant dense<0.000000e+00> : vector<2x128xf32>
    %9 = tpu.matmul %6, %5, %cst_9 {dimension_numbers = #tpu.dot_dimension_numbers<[1], [0], [0], [1], [0, 0, 1, 1], [], []>} : vector<2x32xf32>, vector<32x128xf32>, vector<2x128xf32> -> vector<2x128xf32>
    %10 = arith.addf %8, %9 : vector<2x128xf32>
    %11 = vector.extract_strided_slice %10 {offsets = [0, 0], sizes = [2, 32], strides = [1, 1]} : vector<2x128xf32> to vector<2x32xf32>
    %12 = arith.negf %11 : vector<2x32xf32>
    %13 = math.exp %12 : vector<2x32xf32>
    %cst_10 = arith.constant 1.000000e+00 : f32
    %14 = vector.broadcast %cst_10 : f32 to vector<2x32xf32>
    %15 = arith.addf %14, %13 : vector<2x32xf32>
    %16 = arith.divf %14, %15 : vector<2x32xf32>
    %17 = vector.extract_strided_slice %10 {offsets = [0, 32], sizes = [2, 32], strides = [1, 1]} : vector<2x128xf32> to vector<2x32xf32>
    %18 = arith.negf %17 : vector<2x32xf32>
    %19 = math.exp %18 : vector<2x32xf32>
    %cst_11 = arith.constant 1.000000e+00 : f32
    %20 = vector.broadcast %cst_11 : f32 to vector<2x32xf32>
    %21 = arith.addf %20, %19 : vector<2x32xf32>
    %22 = arith.divf %20, %21 : vector<2x32xf32>
    %23 = vector.extract_strided_slice %10 {offsets = [0, 64], sizes = [2, 32], strides = [1, 1]} : vector<2x128xf32> to vector<2x32xf32>
    %24 = math.tanh %23 : vector<2x32xf32>
    %25 = vector.extract_strided_slice %10 {offsets = [0, 96], sizes = [2, 32], strides = [1, 1]} : vector<2x128xf32> to vector<2x32xf32>
    %26 = arith.negf %25 : vector<2x32xf32>
    %27 = math.exp %26 : vector<2x32xf32>
    %cst_12 = arith.constant 1.000000e+00 : f32
    %28 = vector.broadcast %cst_12 : f32 to vector<2x32xf32>
    %29 = arith.addf %28, %27 : vector<2x32xf32>
    %30 = arith.divf %28, %29 : vector<2x32xf32>
    %31 = arith.mulf %22, %7 : vector<2x32xf32>
    %32 = arith.mulf %16, %24 : vector<2x32xf32>
    %33 = arith.addf %31, %32 : vector<2x32xf32>
    %34 = math.tanh %33 : vector<2x32xf32>
    %35 = arith.mulf %30, %34 : vector<2x32xf32>
    %36 = vector.extract_strided_slice %4 {offsets = [2, 0], sizes = [2, 128], strides = [1, 1]} : vector<16x128xf32> to vector<2x128xf32>
    %cst_13 = arith.constant dense<0.000000e+00> : vector<2x128xf32>
    %37 = tpu.matmul %35, %5, %cst_13 {dimension_numbers = #tpu.dot_dimension_numbers<[1], [0], [0], [1], [0, 0, 1, 1], [], []>} : vector<2x32xf32>, vector<32x128xf32>, vector<2x128xf32> -> vector<2x128xf32>
    %38 = arith.addf %36, %37 : vector<2x128xf32>
    %39 = vector.extract_strided_slice %38 {offsets = [0, 0], sizes = [2, 32], strides = [1, 1]} : vector<2x128xf32> to vector<2x32xf32>
    %40 = arith.negf %39 : vector<2x32xf32>
    %41 = math.exp %40 : vector<2x32xf32>
    %cst_14 = arith.constant 1.000000e+00 : f32
    %42 = vector.broadcast %cst_14 : f32 to vector<2x32xf32>
    %43 = arith.addf %42, %41 : vector<2x32xf32>
    %44 = arith.divf %42, %43 : vector<2x32xf32>
    %45 = vector.extract_strided_slice %38 {offsets = [0, 32], sizes = [2, 32], strides = [1, 1]} : vector<2x128xf32> to vector<2x32xf32>
    %46 = arith.negf %45 : vector<2x32xf32>
    %47 = math.exp %46 : vector<2x32xf32>
    %cst_15 = arith.constant 1.000000e+00 : f32
    %48 = vector.broadcast %cst_15 : f32 to vector<2x32xf32>
    %49 = arith.addf %48, %47 : vector<2x32xf32>
    %50 = arith.divf %48, %49 : vector<2x32xf32>
    %51 = vector.extract_strided_slice %38 {offsets = [0, 64], sizes = [2, 32], strides = [1, 1]} : vector<2x128xf32> to vector<2x32xf32>
    %52 = math.tanh %51 : vector<2x32xf32>
    %53 = vector.extract_strided_slice %38 {offsets = [0, 96], sizes = [2, 32], strides = [1, 1]} : vector<2x128xf32> to vector<2x32xf32>
    %54 = arith.negf %53 : vector<2x32xf32>
    %55 = math.exp %54 : vector<2x32xf32>
    %cst_16 = arith.constant 1.000000e+00 : f32
    %56 = vector.broadcast %cst_16 : f32 to vector<2x32xf32>
    %57 = arith.addf %56, %55 : vector<2x32xf32>
    %58 = arith.divf %56, %57 : vector<2x32xf32>
    %59 = arith.mulf %50, %33 : vector<2x32xf32>
    %60 = arith.mulf %44, %52 : vector<2x32xf32>
    %61 = arith.addf %59, %60 : vector<2x32xf32>
    %62 = math.tanh %61 : vector<2x32xf32>
    %63 = arith.mulf %58, %62 : vector<2x32xf32>
    %64 = vector.extract_strided_slice %4 {offsets = [4, 0], sizes = [2, 128], strides = [1, 1]} : vector<16x128xf32> to vector<2x128xf32>
    %cst_17 = arith.constant dense<0.000000e+00> : vector<2x128xf32>
    %65 = tpu.matmul %63, %5, %cst_17 {dimension_numbers = #tpu.dot_dimension_numbers<[1], [0], [0], [1], [0, 0, 1, 1], [], []>} : vector<2x32xf32>, vector<32x128xf32>, vector<2x128xf32> -> vector<2x128xf32>
    %66 = arith.addf %64, %65 : vector<2x128xf32>
    %67 = vector.extract_strided_slice %66 {offsets = [0, 0], sizes = [2, 32], strides = [1, 1]} : vector<2x128xf32> to vector<2x32xf32>
    %68 = arith.negf %67 : vector<2x32xf32>
    %69 = math.exp %68 : vector<2x32xf32>
    %cst_18 = arith.constant 1.000000e+00 : f32
    %70 = vector.broadcast %cst_18 : f32 to vector<2x32xf32>
    %71 = arith.addf %70, %69 : vector<2x32xf32>
    %72 = arith.divf %70, %71 : vector<2x32xf32>
    %73 = vector.extract_strided_slice %66 {offsets = [0, 32], sizes = [2, 32], strides = [1, 1]} : vector<2x128xf32> to vector<2x32xf32>
    %74 = arith.negf %73 : vector<2x32xf32>
    %75 = math.exp %74 : vector<2x32xf32>
    %cst_19 = arith.constant 1.000000e+00 : f32
    %76 = vector.broadcast %cst_19 : f32 to vector<2x32xf32>
    %77 = arith.addf %76, %75 : vector<2x32xf32>
    %78 = arith.divf %76, %77 : vector<2x32xf32>
    %79 = vector.extract_strided_slice %66 {offsets = [0, 64], sizes = [2, 32], strides = [1, 1]} : vector<2x128xf32> to vector<2x32xf32>
    %80 = math.tanh %79 : vector<2x32xf32>
    %81 = vector.extract_strided_slice %66 {offsets = [0, 96], sizes = [2, 32], strides = [1, 1]} : vector<2x128xf32> to vector<2x32xf32>
    %82 = arith.negf %81 : vector<2x32xf32>
    %83 = math.exp %82 : vector<2x32xf32>
    %cst_20 = arith.constant 1.000000e+00 : f32
    %84 = vector.broadcast %cst_20 : f32 to vector<2x32xf32>
    %85 = arith.addf %84, %83 : vector<2x32xf32>
    %86 = arith.divf %84, %85 : vector<2x32xf32>
    %87 = arith.mulf %78, %61 : vector<2x32xf32>
    %88 = arith.mulf %72, %80 : vector<2x32xf32>
    %89 = arith.addf %87, %88 : vector<2x32xf32>
    %90 = math.tanh %89 : vector<2x32xf32>
    %91 = arith.mulf %86, %90 : vector<2x32xf32>
    %92 = vector.extract_strided_slice %4 {offsets = [6, 0], sizes = [2, 128], strides = [1, 1]} : vector<16x128xf32> to vector<2x128xf32>
    %cst_21 = arith.constant dense<0.000000e+00> : vector<2x128xf32>
    %93 = tpu.matmul %91, %5, %cst_21 {dimension_numbers = #tpu.dot_dimension_numbers<[1], [0], [0], [1], [0, 0, 1, 1], [], []>} : vector<2x32xf32>, vector<32x128xf32>, vector<2x128xf32> -> vector<2x128xf32>
    %94 = arith.addf %92, %93 : vector<2x128xf32>
    %95 = vector.extract_strided_slice %94 {offsets = [0, 0], sizes = [2, 32], strides = [1, 1]} : vector<2x128xf32> to vector<2x32xf32>
    %96 = arith.negf %95 : vector<2x32xf32>
    %97 = math.exp %96 : vector<2x32xf32>
    %cst_22 = arith.constant 1.000000e+00 : f32
    %98 = vector.broadcast %cst_22 : f32 to vector<2x32xf32>
    %99 = arith.addf %98, %97 : vector<2x32xf32>
    %100 = arith.divf %98, %99 : vector<2x32xf32>
    %101 = vector.extract_strided_slice %94 {offsets = [0, 32], sizes = [2, 32], strides = [1, 1]} : vector<2x128xf32> to vector<2x32xf32>
    %102 = arith.negf %101 : vector<2x32xf32>
    %103 = math.exp %102 : vector<2x32xf32>
    %cst_23 = arith.constant 1.000000e+00 : f32
    %104 = vector.broadcast %cst_23 : f32 to vector<2x32xf32>
    %105 = arith.addf %104, %103 : vector<2x32xf32>
    %106 = arith.divf %104, %105 : vector<2x32xf32>
    %107 = vector.extract_strided_slice %94 {offsets = [0, 64], sizes = [2, 32], strides = [1, 1]} : vector<2x128xf32> to vector<2x32xf32>
    %108 = math.tanh %107 : vector<2x32xf32>
    %109 = vector.extract_strided_slice %94 {offsets = [0, 96], sizes = [2, 32], strides = [1, 1]} : vector<2x128xf32> to vector<2x32xf32>
    %110 = arith.negf %109 : vector<2x32xf32>
    %111 = math.exp %110 : vector<2x32xf32>
    %cst_24 = arith.constant 1.000000e+00 : f32
    %112 = vector.broadcast %cst_24 : f32 to vector<2x32xf32>
    %113 = arith.addf %112, %111 : vector<2x32xf32>
    %114 = arith.divf %112, %113 : vector<2x32xf32>
    %115 = arith.mulf %106, %89 : vector<2x32xf32>
    %116 = arith.mulf %100, %108 : vector<2x32xf32>
    %117 = arith.addf %115, %116 : vector<2x32xf32>
    %118 = math.tanh %117 : vector<2x32xf32>
    %119 = arith.mulf %114, %118 : vector<2x32xf32>
    %120 = vector.extract_strided_slice %4 {offsets = [8, 0], sizes = [2, 128], strides = [1, 1]} : vector<16x128xf32> to vector<2x128xf32>
    %cst_25 = arith.constant dense<0.000000e+00> : vector<2x128xf32>
    %121 = tpu.matmul %119, %5, %cst_25 {dimension_numbers = #tpu.dot_dimension_numbers<[1], [0], [0], [1], [0, 0, 1, 1], [], []>} : vector<2x32xf32>, vector<32x128xf32>, vector<2x128xf32> -> vector<2x128xf32>
    %122 = arith.addf %120, %121 : vector<2x128xf32>
    %123 = vector.extract_strided_slice %122 {offsets = [0, 0], sizes = [2, 32], strides = [1, 1]} : vector<2x128xf32> to vector<2x32xf32>
    %124 = arith.negf %123 : vector<2x32xf32>
    %125 = math.exp %124 : vector<2x32xf32>
    %cst_26 = arith.constant 1.000000e+00 : f32
    %126 = vector.broadcast %cst_26 : f32 to vector<2x32xf32>
    %127 = arith.addf %126, %125 : vector<2x32xf32>
    %128 = arith.divf %126, %127 : vector<2x32xf32>
    %129 = vector.extract_strided_slice %122 {offsets = [0, 32], sizes = [2, 32], strides = [1, 1]} : vector<2x128xf32> to vector<2x32xf32>
    %130 = arith.negf %129 : vector<2x32xf32>
    %131 = math.exp %130 : vector<2x32xf32>
    %cst_27 = arith.constant 1.000000e+00 : f32
    %132 = vector.broadcast %cst_27 : f32 to vector<2x32xf32>
    %133 = arith.addf %132, %131 : vector<2x32xf32>
    %134 = arith.divf %132, %133 : vector<2x32xf32>
    %135 = vector.extract_strided_slice %122 {offsets = [0, 64], sizes = [2, 32], strides = [1, 1]} : vector<2x128xf32> to vector<2x32xf32>
    %136 = math.tanh %135 : vector<2x32xf32>
    %137 = vector.extract_strided_slice %122 {offsets = [0, 96], sizes = [2, 32], strides = [1, 1]} : vector<2x128xf32> to vector<2x32xf32>
    %138 = arith.negf %137 : vector<2x32xf32>
    %139 = math.exp %138 : vector<2x32xf32>
    %cst_28 = arith.constant 1.000000e+00 : f32
    %140 = vector.broadcast %cst_28 : f32 to vector<2x32xf32>
    %141 = arith.addf %140, %139 : vector<2x32xf32>
    %142 = arith.divf %140, %141 : vector<2x32xf32>
    %143 = arith.mulf %134, %117 : vector<2x32xf32>
    %144 = arith.mulf %128, %136 : vector<2x32xf32>
    %145 = arith.addf %143, %144 : vector<2x32xf32>
    %146 = math.tanh %145 : vector<2x32xf32>
    %147 = arith.mulf %142, %146 : vector<2x32xf32>
    %148 = vector.extract_strided_slice %4 {offsets = [10, 0], sizes = [2, 128], strides = [1, 1]} : vector<16x128xf32> to vector<2x128xf32>
    %cst_29 = arith.constant dense<0.000000e+00> : vector<2x128xf32>
    %149 = tpu.matmul %147, %5, %cst_29 {dimension_numbers = #tpu.dot_dimension_numbers<[1], [0], [0], [1], [0, 0, 1, 1], [], []>} : vector<2x32xf32>, vector<32x128xf32>, vector<2x128xf32> -> vector<2x128xf32>
    %150 = arith.addf %148, %149 : vector<2x128xf32>
    %151 = vector.extract_strided_slice %150 {offsets = [0, 0], sizes = [2, 32], strides = [1, 1]} : vector<2x128xf32> to vector<2x32xf32>
    %152 = arith.negf %151 : vector<2x32xf32>
    %153 = math.exp %152 : vector<2x32xf32>
    %cst_30 = arith.constant 1.000000e+00 : f32
    %154 = vector.broadcast %cst_30 : f32 to vector<2x32xf32>
    %155 = arith.addf %154, %153 : vector<2x32xf32>
    %156 = arith.divf %154, %155 : vector<2x32xf32>
    %157 = vector.extract_strided_slice %150 {offsets = [0, 32], sizes = [2, 32], strides = [1, 1]} : vector<2x128xf32> to vector<2x32xf32>
    %158 = arith.negf %157 : vector<2x32xf32>
    %159 = math.exp %158 : vector<2x32xf32>
    %cst_31 = arith.constant 1.000000e+00 : f32
    %160 = vector.broadcast %cst_31 : f32 to vector<2x32xf32>
    %161 = arith.addf %160, %159 : vector<2x32xf32>
    %162 = arith.divf %160, %161 : vector<2x32xf32>
    %163 = vector.extract_strided_slice %150 {offsets = [0, 64], sizes = [2, 32], strides = [1, 1]} : vector<2x128xf32> to vector<2x32xf32>
    %164 = math.tanh %163 : vector<2x32xf32>
    %165 = vector.extract_strided_slice %150 {offsets = [0, 96], sizes = [2, 32], strides = [1, 1]} : vector<2x128xf32> to vector<2x32xf32>
    %166 = arith.negf %165 : vector<2x32xf32>
    %167 = math.exp %166 : vector<2x32xf32>
    %cst_32 = arith.constant 1.000000e+00 : f32
    %168 = vector.broadcast %cst_32 : f32 to vector<2x32xf32>
    %169 = arith.addf %168, %167 : vector<2x32xf32>
    %170 = arith.divf %168, %169 : vector<2x32xf32>
    %171 = arith.mulf %162, %145 : vector<2x32xf32>
    %172 = arith.mulf %156, %164 : vector<2x32xf32>
    %173 = arith.addf %171, %172 : vector<2x32xf32>
    %174 = math.tanh %173 : vector<2x32xf32>
    %175 = arith.mulf %170, %174 : vector<2x32xf32>
    %176 = vector.extract_strided_slice %4 {offsets = [12, 0], sizes = [2, 128], strides = [1, 1]} : vector<16x128xf32> to vector<2x128xf32>
    %cst_33 = arith.constant dense<0.000000e+00> : vector<2x128xf32>
    %177 = tpu.matmul %175, %5, %cst_33 {dimension_numbers = #tpu.dot_dimension_numbers<[1], [0], [0], [1], [0, 0, 1, 1], [], []>} : vector<2x32xf32>, vector<32x128xf32>, vector<2x128xf32> -> vector<2x128xf32>
    %178 = arith.addf %176, %177 : vector<2x128xf32>
    %179 = vector.extract_strided_slice %178 {offsets = [0, 0], sizes = [2, 32], strides = [1, 1]} : vector<2x128xf32> to vector<2x32xf32>
    %180 = arith.negf %179 : vector<2x32xf32>
    %181 = math.exp %180 : vector<2x32xf32>
    %cst_34 = arith.constant 1.000000e+00 : f32
    %182 = vector.broadcast %cst_34 : f32 to vector<2x32xf32>
    %183 = arith.addf %182, %181 : vector<2x32xf32>
    %184 = arith.divf %182, %183 : vector<2x32xf32>
    %185 = vector.extract_strided_slice %178 {offsets = [0, 32], sizes = [2, 32], strides = [1, 1]} : vector<2x128xf32> to vector<2x32xf32>
    %186 = arith.negf %185 : vector<2x32xf32>
    %187 = math.exp %186 : vector<2x32xf32>
    %cst_35 = arith.constant 1.000000e+00 : f32
    %188 = vector.broadcast %cst_35 : f32 to vector<2x32xf32>
    %189 = arith.addf %188, %187 : vector<2x32xf32>
    %190 = arith.divf %188, %189 : vector<2x32xf32>
    %191 = vector.extract_strided_slice %178 {offsets = [0, 64], sizes = [2, 32], strides = [1, 1]} : vector<2x128xf32> to vector<2x32xf32>
    %192 = math.tanh %191 : vector<2x32xf32>
    %193 = vector.extract_strided_slice %178 {offsets = [0, 96], sizes = [2, 32], strides = [1, 1]} : vector<2x128xf32> to vector<2x32xf32>
    %194 = arith.negf %193 : vector<2x32xf32>
    %195 = math.exp %194 : vector<2x32xf32>
    %cst_36 = arith.constant 1.000000e+00 : f32
    %196 = vector.broadcast %cst_36 : f32 to vector<2x32xf32>
    %197 = arith.addf %196, %195 : vector<2x32xf32>
    %198 = arith.divf %196, %197 : vector<2x32xf32>
    %199 = arith.mulf %190, %173 : vector<2x32xf32>
    %200 = arith.mulf %184, %192 : vector<2x32xf32>
    %201 = arith.addf %199, %200 : vector<2x32xf32>
    %202 = math.tanh %201 : vector<2x32xf32>
    %203 = arith.mulf %198, %202 : vector<2x32xf32>
    %204 = vector.extract_strided_slice %4 {offsets = [14, 0], sizes = [2, 128], strides = [1, 1]} : vector<16x128xf32> to vector<2x128xf32>
    %cst_37 = arith.constant dense<0.000000e+00> : vector<2x128xf32>
    %205 = tpu.matmul %203, %5, %cst_37 {dimension_numbers = #tpu.dot_dimension_numbers<[1], [0], [0], [1], [0, 0, 1, 1], [], []>} : vector<2x32xf32>, vector<32x128xf32>, vector<2x128xf32> -> vector<2x128xf32>
    %206 = arith.addf %204, %205 : vector<2x128xf32>
    %207 = vector.extract_strided_slice %206 {offsets = [0, 0], sizes = [2, 32], strides = [1, 1]} : vector<2x128xf32> to vector<2x32xf32>
    %208 = arith.negf %207 : vector<2x32xf32>
    %209 = math.exp %208 : vector<2x32xf32>
    %cst_38 = arith.constant 1.000000e+00 : f32
    %210 = vector.broadcast %cst_38 : f32 to vector<2x32xf32>
    %211 = arith.addf %210, %209 : vector<2x32xf32>
    %212 = arith.divf %210, %211 : vector<2x32xf32>
    %213 = vector.extract_strided_slice %206 {offsets = [0, 32], sizes = [2, 32], strides = [1, 1]} : vector<2x128xf32> to vector<2x32xf32>
    %214 = arith.negf %213 : vector<2x32xf32>
    %215 = math.exp %214 : vector<2x32xf32>
    %cst_39 = arith.constant 1.000000e+00 : f32
    %216 = vector.broadcast %cst_39 : f32 to vector<2x32xf32>
    %217 = arith.addf %216, %215 : vector<2x32xf32>
    %218 = arith.divf %216, %217 : vector<2x32xf32>
    %219 = vector.extract_strided_slice %206 {offsets = [0, 64], sizes = [2, 32], strides = [1, 1]} : vector<2x128xf32> to vector<2x32xf32>
    %220 = math.tanh %219 : vector<2x32xf32>
    %221 = vector.extract_strided_slice %206 {offsets = [0, 96], sizes = [2, 32], strides = [1, 1]} : vector<2x128xf32> to vector<2x32xf32>
    %222 = arith.negf %221 : vector<2x32xf32>
    %223 = math.exp %222 : vector<2x32xf32>
    %cst_40 = arith.constant 1.000000e+00 : f32
    %224 = vector.broadcast %cst_40 : f32 to vector<2x32xf32>
    %225 = arith.addf %224, %223 : vector<2x32xf32>
    %226 = arith.divf %224, %225 : vector<2x32xf32>
    %227 = arith.mulf %218, %201 : vector<2x32xf32>
    %228 = arith.mulf %212, %220 : vector<2x32xf32>
    %229 = arith.addf %227, %228 : vector<2x32xf32>
    %230 = math.tanh %229 : vector<2x32xf32>
    %231 = arith.mulf %226, %230 : vector<2x32xf32>
    %232 = tpu.concatenate %35, %63, %91, %119, %147, %175, %203, %231 in 1 : vector<2x32xf32>, vector<2x32xf32>, vector<2x32xf32>, vector<2x32xf32>, vector<2x32xf32>, vector<2x32xf32>, vector<2x32xf32>, vector<2x32xf32> -> vector<2x256xf32>
    %c0_41 = arith.constant 0 : index
    %c0_42 = arith.constant 0 : index
    %233 = vector.load %arg4[%c0_41, %c0_42] : memref<256x128xf32, #tpu.memory_space<vmem>>, vector<256x128xf32>
    %cst_43 = arith.constant dense<0.000000e+00> : vector<2x128xf32>
    %234 = tpu.matmul %232, %233, %cst_43 {dimension_numbers = #tpu.dot_dimension_numbers<[1], [0], [0], [1], [0, 0, 1, 1], [], []>} : vector<2x256xf32>, vector<256x128xf32>, vector<2x128xf32> -> vector<2x128xf32>
    %c0_44 = arith.constant 0 : index
    %c0_45 = arith.constant 0 : index
    %235 = vector.load %arg5[%c0_44, %c0_45] : memref<1x128xf32, #tpu.memory_space<vmem>>, vector<1x128xf32>
    %236 = vector.broadcast %235 : vector<1x128xf32> to vector<2x128xf32>
    %237 = arith.addf %234, %236 : vector<2x128xf32>
    %c0_46 = arith.constant 0 : index
    %c0_47 = arith.constant 0 : index
    %238 = vector.load %arg6[%c0_46, %c0_47] : memref<2x128xf32, #tpu.memory_space<vmem>>, vector<2x128xf32>
    tpu.vector_store %arg6[%c0_46, %c0_47], %237 {strides = array<i32>} : memref<2x128xf32, #tpu.memory_space<vmem>>, vector<2x128xf32>,
    return
  }
}

</mosaic_0001>

<llo_original>
// kernel: tpu_custom_call.1
$region0: #{tpu_custom_call.1}
  #allocation0 [shape = 'u32[]', space=smem, size = 0x4, offset = 0x4, fixed_abs, tag = 'smem constant byte address 0x4 - core index']
  #allocation1 [shape = 'u32[72,128]{1,0:T(1,128)}', space=vmem, size = 0x9000, scoped, tag = 'internal scratch']
  %s0 = inlined_call_operand.hbm [shape: f32[16,12], index: 0, kind: input, shape index: {}]
  %s1 = inlined_call_operand.hbm [shape: f32[12,128], index: 1, kind: input, shape index: {}]
  %s2 = inlined_call_operand.hbm [shape: f32[16,128], index: 2, kind: input, shape index: {}]
  %s3 = inlined_call_operand.hbm [shape: f32[32,128], index: 3, kind: input, shape index: {}]
  %s4 = inlined_call_operand.hbm [shape: f32[256,128], index: 4, kind: input, shape index: {}]
  %s5 = inlined_call_operand.vmem [shape: f32[1,128], index: 5, kind: input, shape index: {}]
  %s6 = inlined_call_operand.hbm [shape: f32[2,128], index: 6, kind: output, shape index: {}]
  %s7 = sld [smem:[#allocation0]]
  $region54: #{tpu_custom_call.1} parent=0
    _
  %s9 = ssub.s32 1, %s7
  %s10 = scalar_select 0, %s9, %s7
  $region1: #{tpu_custom_call.1} parent=0
    #allocation2 [shape = 'u8[8192]{0}', space=vmem, size = 0x2000, scoped, tag = 'input window, operand 0, single buffered']
    #allocation3 [shape = 's32[1]{0}', space=sflag, size = 0x4, scoped, tag = 'scoped memory for tpu_custom_call.1']
    #allocation4 [shape = 's32[1]{0}', space=sflag, size = 0x4, scoped, tag = 'scoped memory for tpu_custom_call.1']
    #allocation5 [shape = 'u8[8192]{0}', space=vmem, size = 0x2000, scoped, tag = 'input window, operand 1, single buffered']
    #allocation6 [shape = 's32[1]{0}', space=sflag, size = 0x4, scoped, tag = 'scoped memory for tpu_custom_call.1']
    #allocation7 [shape = 'u8[8192]{0}', space=vmem, size = 0x2000, scoped, tag = 'input window, operand 2, single buffered']
    #allocation8 [shape = 'u8[16384]{0}', space=vmem, size = 0x4000, scoped, tag = 'input window, operand 3, single buffered']
    #allocation9 [shape = 's32[1]{0}', space=sflag, size = 0x4, scoped, tag = 'scoped memory for tpu_custom_call.1']
    #allocation10 [shape = 'u8[131072]{0}', space=vmem, size = 0x20000, scoped, tag = 'input window, operand 4, single buffered']
    #allocation11 [shape = 'u8[1024]{0}', space=vmem, size = 0x400, scoped, tag = 'output window, operand 0, single buffered']
    %11 = vsyncpa [#allocation3], 0
    %12 = vsyncpa [#allocation6], 0
    %13 = vsyncpa [#allocation9], 0
    %14 = vsyncpa [#allocation4], 0
    // Predicated region
    $region2: #{tpu_custom_call.1} parent=1 // pred_check
      _
    $region3: #{tpu_custom_call.1} parent=1 // pred_check_branch
      %16 = sbr.rel (0) target = $region5
    $region4: #{tpu_custom_call.1} parent=1 // pred_region
      %18 = vsyncadd [#allocation3], 0
      %s19 = sshll.u32 %s0, 4
      %s20 = int_to_ptr.hbm [resolvable:$true] %s19
      %s21 = sshll.u32 [#allocation2], 4
      %s22 = int_to_ptr.vmem [resolvable:$true] %s21
      %27 = dma.hbm_to_vmem [thread:$0]  %s20, 256, %s22, [#allocation3], 128, 128, 8
    $region5: #{tpu_custom_call.1} parent=1 // pred_fallthru
      _
    // Predicated region
    $region6: #{tpu_custom_call.1} parent=1 // pred_check
      _
    $region7: #{tpu_custom_call.1} parent=1 // pred_check_branch
      %29 = sbr.rel (0) target = $region9
    $region8: #{tpu_custom_call.1} parent=1 // pred_region
      %31 = vsyncadd [#allocation6], 0
      %s32 = sshll.u32 %s1, 4
      %s33 = int_to_ptr.hbm [resolvable:$true] %s32
      %s34 = sshll.u32 [#allocation5], 4
      %s35 = int_to_ptr.vmem [resolvable:$true] %s34
      %40 = dma.hbm_to_vmem [thread:$0]  %s33, 256, %s35, [#allocation6], 128, 128, 8
    $region9: #{tpu_custom_call.1} parent=1 // pred_fallthru
      _
    // Predicated region
    $region10: #{tpu_custom_call.1} parent=1 // pred_check
      _
    $region11: #{tpu_custom_call.1} parent=1 // pred_check_branch
      %42 = sbr.rel (0) target = $region13
    $region12: #{tpu_custom_call.1} parent=1 // pred_region
      %44 = vsyncadd [#allocation6], 0
      %s45 = sshll.u32 %s2, 4
      %s46 = int_to_ptr.hbm [resolvable:$true] %s45
      %s47 = sshll.u32 [#allocation7], 4
      %s48 = int_to_ptr.vmem [resolvable:$true] %s47
      %53 = dma.hbm_to_vmem [thread:$0]  %s46, 256, %s48, [#allocation6], 128, 128, 8
    $region13: #{tpu_custom_call.1} parent=1 // pred_fallthru
      _
    // Predicated region
    $region14: #{tpu_custom_call.1} parent=1 // pred_check
      _
    $region15: #{tpu_custom_call.1} parent=1 // pred_check_branch
      %55 = sbr.rel (0) target = $region17
    $region16: #{tpu_custom_call.1} parent=1 // pred_region
      %57 = vsyncadd [#allocation9], 0
      %s58 = sshll.u32 %s3, 4
      %s59 = int_to_ptr.hbm [resolvable:$true] %s58
      %s60 = sshll.u32 [#allocation8], 4
      %s61 = int_to_ptr.vmem [resolvable:$true] %s60
      %66 = dma.hbm_to_vmem [thread:$0]  %s59, 512, %s61, [#allocation9], 128, 128, 8
    $region17: #{tpu_custom_call.1} parent=1 // pred_fallthru
      _
    // Predicated region
    $region18: #{tpu_custom_call.1} parent=1 // pred_check
      _
    $region19: #{tpu_custom_call.1} parent=1 // pred_check_branch
      %68 = sbr.rel (0) target = $region21
    $region20: #{tpu_custom_call.1} parent=1 // pred_region
      %70 = vsyncadd [#allocation9], 0
      %s71 = sshll.u32 %s4, 4
      %s72 = int_to_ptr.hbm [resolvable:$true] %s71
      %s73 = sshll.u32 [#allocation10], 4
      %s74 = int_to_ptr.vmem [resolvable:$true] %s73
      %79 = dma.hbm_to_vmem [thread:$0]  %s72, 4096, %s74, [#allocation9], 128, 128, 8
    $region21: #{tpu_custom_call.1} parent=1 // pred_fallthru
      _
    // Predicated region
    $region22: #{tpu_custom_call.1} parent=1 // pred_check
      _
    $region23: #{tpu_custom_call.1} parent=1 // pred_check_branch
      %81 = sbr.rel (0) target = $region25
    $region24: #{tpu_custom_call.1} parent=1 // pred_region
      _
    $region25: #{tpu_custom_call.1} parent=1 // pred_fallthru
      _
    // Predicated region
    $region26: #{tpu_custom_call.1} parent=1 // pred_check
      _
    $region27: #{tpu_custom_call.1} parent=1 // pred_check_branch
      %83 = sbr.rel (0) target = $region29
    $region28: #{tpu_custom_call.1} parent=1 // pred_region
      %85 = dma.done [#allocation3], 256
    $region29: #{tpu_custom_call.1} parent=1 // pred_fallthru
      _
    // Predicated region
    $region30: #{tpu_custom_call.1} parent=1 // pred_check
      _
    $region31: #{tpu_custom_call.1} parent=1 // pred_check_branch
      %87 = sbr.rel (0) target = $region33
    $region32: #{tpu_custom_call.1} parent=1 // pred_region
      %89 = dma.done [#allocation6], 256
    $region33: #{tpu_custom_call.1} parent=1 // pred_fallthru
      _
    // Predicated region
    $region34: #{tpu_custom_call.1} parent=1 // pred_check
      _
    $region35: #{tpu_custom_call.1} parent=1 // pred_check_branch
      %91 = sbr.rel (0) target = $region37
    $region36: #{tpu_custom_call.1} parent=1 // pred_region
      %93 = dma.done [#allocation6], 256
    $region37: #{tpu_custom_call.1} parent=1 // pred_fallthru
      _
    // Predicated region
    $region38: #{tpu_custom_call.1} parent=1 // pred_check
      _
    $region39: #{tpu_custom_call.1} parent=1 // pred_check_branch
      %95 = sbr.rel (0) target = $region41
    $region40: #{tpu_custom_call.1} parent=1 // pred_region
      %97 = dma.done [#allocation9], 512
    $region41: #{tpu_custom_call.1} parent=1 // pred_fallthru
      _
    // Predicated region
    $region42: #{tpu_custom_call.1} parent=1 // pred_check
      _
    $region43: #{tpu_custom_call.1} parent=1 // pred_check_branch
      %99 = sbr.rel (0) target = $region45
    $region44: #{tpu_custom_call.1} parent=1 // pred_region
      %101 = dma.done [#allocation9], 4096
    $region45: #{tpu_custom_call.1} parent=1 // pred_fallthru
      _
    %v102 = vld [vmem:[#allocation2] sm:$0xff]
    %v103 = vld [vmem:[#allocation2 + $0x8] sm:$0xff]
    %v104 = vld [vmem:[#allocation5] sm:$0xff]
    %v105 = vld [vmem:[#allocation5 + $0x8] sm:$0xf]
    %v106 = vld [vmem:[#allocation7] sm:$0xff]
    %v107 = vld [vmem:[#allocation7 + $0x8] sm:$0xff]
    %vm108 = vcmask 97280
    %v110 = vsel %vm108, %v102, 0
    %v113 = vsel %vm108, %v103, 0
    %vm115 = vcmask 1043456
    %v117 = vsel %vm115, %v105, 0
    %119 = vmatpush.msra.mxu0 0.0
    %120 = vmatpush.msra.mxu0 0.0
    %121 = vmatpush.msra.mxu0 0.0
    %122 = vmatpush.msra.mxu0 0.0
    %123 = vmatpush.msra.mxu0 0.0
    %124 = vmatpush.msra.mxu0 0.0
    %125 = vmatpush.msra.mxu0 0.0
    %126 = vmatpush.msra.mxu0 0.0
    %127 = vmatpush.msra.mxu0 0.0
    %128 = vmatpush.msra.mxu0 0.0
    %129 = vmatpush.msra.mxu0 0.0
    %130 = vmatpush.msra.mxu0 0.0
    %131 = vmatpush.msra.mxu0 0.0
    %132 = vmatpush.msra.mxu0 0.0
    %133 = vmatpush.msra.mxu0 %v117
    %134 = vmatpush.msra.mxu0 %v104
    %135 = vmatmul.f32.gmra.mxu0 %v110
    %v136 = vpop.f32.mrf.mxu0
    %v137 = vadd.f32 %v106, %v136
    %138 = vmatmul.f32.gmra.mxu0 %v113
    %v139 = vpop.f32.mrf.mxu0
    %v140 = vadd.f32 %v107, %v139
    %141 = vdwg.mxu0
    %v142 = vld [vmem:[#allocation8] sm:$0xff]
    %v143 = vld [vmem:[#allocation8 + $0x8] sm:$0xff]
    %v144 = vld [vmem:[#allocation8 + $0x10] sm:$0xff]
    %v145 = vld [vmem:[#allocation8 + $0x18] sm:$0xff]
    %vm146 = vcmask 261120
    %v148 = vsel %vm146, 0.0, 0
    %150 = vmatpush.msra.mxu0 0.0
    %151 = vmatpush.msra.mxu0 0.0
    %152 = vmatpush.msra.mxu0 0.0
    %153 = vmatpush.msra.mxu0 0.0
    %154 = vmatpush.msra.mxu0 0.0
    %155 = vmatpush.msra.mxu0 0.0
    %156 = vmatpush.msra.mxu0 0.0
    %157 = vmatpush.msra.mxu0 0.0
    %158 = vmatpush.msra.mxu0 0.0
    %159 = vmatpush.msra.mxu0 0.0
    %160 = vmatpush.msra.mxu0 0.0
    %161 = vmatpush.msra.mxu0 0.0
    %162 = vmatpush.msra.mxu0 %v145
    %163 = vmatpush.msra.mxu0 %v144
    %164 = vmatpush.msra.mxu0 %v143
    %165 = vmatpush.msra.mxu0 %v142
    %166 = vmatmul.f32.gmra.mxu0 %v148
    %v167 = vpop.f32.mrf.mxu0
    %v168 = vadd.f32 0.0, %v167
    %169 = vdwg.mxu0
    %v170 = vadd.f32 %v137, %v168
    %v171 = vxor.u32 %v170, 2147483648
    %v172 = vmul.f32 %v171, 1.442695
    %v173 = vpow.pop %v172
    %v174 = vadd.f32 %v173, 1.0
    %v175 = vrcp.pop %v174
    %v176 = vmul.f32 %v174, %v175
    %v177 = vsub.f32 1.0, %v176
    %v178 = vmul.f32 %v175, %v177
    %v179 = vadd.f32 %v175, %v178
    %vm180 = vweird.f32 %v174
    %vm181 = vweird.f32 %v175
    %vm182 = vmor %vm180, %vm181
    %v183 = vsel %vm182, %v175, %v179
    %v184 = vand.u32 2147483647, %v174
    %vm185 = vcmp.eq.f32.partialorder %v184, 8.507059e+37
    %v186 = vand.u32 %v174, 2147483648
    %v187 = vor.u32 1.1754944e-38, %v186
    %v188 = vsel %vm185, %v187, %v183
    %v189 = vmul.f32 1.0, %v188
    %v190 = vtanh.pop %v170
    %v191 = vmul.f32 %v189, 0.0
    %193 = vrot.lane.b32.xlu0 %v190, 64
    %v194 = vpop.permute.xlu0 %193
    %v196 = vmul.f32 %v189, %v194
    %198 = vrot.lane.b32.xlu0 %v196, 32
    %v199 = vpop.permute.xlu0 %198
    %v201 = vadd.f32 %v191, %v199
    %v202 = vtanh.pop %v201
    %204 = vrot.lane.b32.xlu0 %v202, 64
    %v205 = vpop.permute.xlu0 %204
    %v207 = vmul.f32 %v189, %v205
    %209 = vrot.lane.b32.xlu0 %v207, 32
    %v210 = vpop.permute.xlu0 %209
    %v211 = vsel %vm146, %v210, 0
    %213 = vmatpush.msra.mxu0 0.0
    %214 = vmatpush.msra.mxu0 0.0
    %215 = vmatpush.msra.mxu0 0.0
    %216 = vmatpush.msra.mxu0 0.0
    %217 = vmatpush.msra.mxu0 0.0
    %218 = vmatpush.msra.mxu0 0.0
    %219 = vmatpush.msra.mxu0 0.0
    %220 = vmatpush.msra.mxu0 0.0
    %221 = vmatpush.msra.mxu0 0.0
    %222 = vmatpush.msra.mxu0 0.0
    %223 = vmatpush.msra.mxu0 0.0
    %224 = vmatpush.msra.mxu0 0.0
    %225 = vmatpush.msra.mxu0 %v145
    %226 = vmatpush.msra.mxu0 %v144
    %227 = vmatpush.msra.mxu0 %v143
    %228 = vmatpush.msra.mxu0 %v142
    %229 = vmatmul.f32.gmra.mxu0 %v211
    %v230 = vpop.f32.mrf.mxu0
    %v231 = vadd.f32 0.0, %v230
    %232 = vdwg.mxu0
    %v234 = vrot.slane %v231, 6
    %v236 = vadd.f32 %v137, %v234
    %v237 = vxor.u32 %v236, 2147483648
    %v238 = vmul.f32 %v237, 1.442695
    %v239 = vpow.pop %v238
    %v240 = vadd.f32 %v239, 1.0
    %v241 = vrcp.pop %v240
    %v242 = vmul.f32 %v240, %v241
    %v243 = vsub.f32 1.0, %v242
    %v244 = vmul.f32 %v241, %v243
    %v245 = vadd.f32 %v241, %v244
    %vm246 = vweird.f32 %v240
    %vm247 = vweird.f32 %v241
    %vm248 = vmor %vm246, %vm247
    %v249 = vsel %vm248, %v241, %v245
    %v250 = vand.u32 2147483647, %v240
    %vm251 = vcmp.eq.f32.partialorder %v250, 8.507059e+37
    %v252 = vand.u32 %v240, 2147483648
    %v253 = vor.u32 1.1754944e-38, %v252
    %v254 = vsel %vm251, %v253, %v249
    %v255 = vmul.f32 1.0, %v254
    %v256 = vtanh.pop %v236
    %v258 = vrot.slane %v201, 6
    %v260 = vmul.f32 %v255, %v258
    %262 = vrot.lane.b32.xlu0 %v256, 64
    %v263 = vpop.permute.xlu0 %262
    %v265 = vmul.f32 %v255, %v263
    %267 = vrot.lane.b32.xlu0 %v265, 32
    %v268 = vpop.permute.xlu0 %267
    %v270 = vadd.f32 %v260, %v268
    %v271 = vtanh.pop %v270
    %273 = vrot.lane.b32.xlu0 %v271, 64
    %v274 = vpop.permute.xlu0 %273
    %v276 = vmul.f32 %v255, %v274
    %v278 = vrot.slane %v276, 2
    %279 = vrot.lane.b32.xlu0 %v278, 32
    %v280 = vpop.permute.xlu0 %279
    %v281 = vsel %vm146, %v280, 0
    %283 = vmatpush.msra.mxu0 0.0
    %284 = vmatpush.msra.mxu0 0.0
    %285 = vmatpush.msra.mxu0 0.0
    %286 = vmatpush.msra.mxu0 0.0
    %287 = vmatpush.msra.mxu0 0.0
    %288 = vmatpush.msra.mxu0 0.0
    %289 = vmatpush.msra.mxu0 0.0
    %290 = vmatpush.msra.mxu0 0.0
    %291 = vmatpush.msra.mxu0 0.0
    %292 = vmatpush.msra.mxu0 0.0
    %293 = vmatpush.msra.mxu0 0.0
    %294 = vmatpush.msra.mxu0 0.0
    %295 = vmatpush.msra.mxu0 %v145
    %296 = vmatpush.msra.mxu0 %v144
    %297 = vmatpush.msra.mxu0 %v143
    %298 = vmatpush.msra.mxu0 %v142
    %299 = vmatmul.f32.gmra.mxu0 %v281
    %v300 = vpop.f32.mrf.mxu0
    %v301 = vadd.f32 0.0, %v300
    %302 = vdwg.mxu0
    %v304 = vrot.slane %v301, 4
    %v306 = vadd.f32 %v137, %v304
    %v307 = vxor.u32 %v306, 2147483648
    %v308 = vmul.f32 %v307, 1.442695
    %v309 = vpow.pop %v308
    %v310 = vadd.f32 %v309, 1.0
    %v311 = vrcp.pop %v310
    %v312 = vmul.f32 %v310, %v311
    %v313 = vsub.f32 1.0, %v312
    %v314 = vmul.f32 %v311, %v313
    %v315 = vadd.f32 %v311, %v314
    %vm316 = vweird.f32 %v310
    %vm317 = vweird.f32 %v311
    %vm318 = vmor %vm316, %vm317
    %v319 = vsel %vm318, %v311, %v315
    %v320 = vand.u32 2147483647, %v310
    %vm321 = vcmp.eq.f32.partialorder %v320, 8.507059e+37
    %v322 = vand.u32 %v310, 2147483648
    %v323 = vor.u32 1.1754944e-38, %v322
    %v324 = vsel %vm321, %v323, %v319
    %v325 = vmul.f32 1.0, %v324
    %v326 = vtanh.pop %v306
    %v328 = vrot.slane %v270, 6
    %v330 = vmul.f32 %v325, %v328
    %332 = vrot.lane.b32.xlu0 %v326, 64
    %v333 = vpop.permute.xlu0 %332
    %v335 = vmul.f32 %v325, %v333
    %337 = vrot.lane.b32.xlu0 %v335, 32
    %v338 = vpop.permute.xlu0 %337
    %v340 = vadd.f32 %v330, %v338
    %v341 = vtanh.pop %v340
    %343 = vrot.lane.b32.xlu0 %v341, 64
    %v344 = vpop.permute.xlu0 %343
    %v346 = vmul.f32 %v325, %v344
    %v348 = vrot.slane %v346, 4
    %349 = vrot.lane.b32.xlu0 %v348, 32
    %v350 = vpop.permute.xlu0 %349
    %v351 = vsel %vm146, %v350, 0
    %353 = vmatpush.msra.mxu0 0.0
    %354 = vmatpush.msra.mxu0 0.0
    %355 = vmatpush.msra.mxu0 0.0
    %356 = vmatpush.msra.mxu0 0.0
    %357 = vmatpush.msra.mxu0 0.0
    %358 = vmatpush.msra.mxu0 0.0
    %359 = vmatpush.msra.mxu0 0.0
    %360 = vmatpush.msra.mxu0 0.0
    %361 = vmatpush.msra.mxu0 0.0
    %362 = vmatpush.msra.mxu0 0.0
    %363 = vmatpush.msra.mxu0 0.0
    %364 = vmatpush.msra.mxu0 0.0
    %365 = vmatpush.msra.mxu0 %v145
    %366 = vmatpush.msra.mxu0 %v144
    %367 = vmatpush.msra.mxu0 %v143
    %368 = vmatpush.msra.mxu0 %v142
    %369 = vmatmul.f32.gmra.mxu0 %v351
    %v370 = vpop.f32.mrf.mxu0
    %v371 = vadd.f32 0.0, %v370
    %372 = vdwg.mxu0
    %v374 = vrot.slane %v371, 2
    %v376 = vadd.f32 %v137, %v374
    %v377 = vxor.u32 %v376, 2147483648
    %v378 = vmul.f32 %v377, 1.442695
    %v379 = vpow.pop %v378
    %v380 = vadd.f32 %v379, 1.0
    %v381 = vrcp.pop %v380
    %v382 = vmul.f32 %v380, %v381
    %v383 = vsub.f32 1.0, %v382
    %v384 = vmul.f32 %v381, %v383
    %v385 = vadd.f32 %v381, %v384
    %vm386 = vweird.f32 %v380
    %vm387 = vweird.f32 %v381
    %vm388 = vmor %vm386, %vm387
    %v389 = vsel %vm388, %v381, %v385
    %v390 = vand.u32 2147483647, %v380
    %vm391 = vcmp.eq.f32.partialorder %v390, 8.507059e+37
    %v392 = vand.u32 %v380, 2147483648
    %v393 = vor.u32 1.1754944e-38, %v392
    %v394 = vsel %vm391, %v393, %v389
    %v395 = vmul.f32 1.0, %v394
    %v396 = vtanh.pop %v376
    %v398 = vrot.slane %v340, 6
    %v400 = vmul.f32 %v395, %v398
    %402 = vrot.lane.b32.xlu0 %v396, 64
    %v403 = vpop.permute.xlu0 %402
    %v405 = vmul.f32 %v395, %v403
    %407 = vrot.lane.b32.xlu0 %v405, 32
    %v408 = vpop.permute.xlu0 %407
    %v410 = vadd.f32 %v400, %v408
    %v411 = vtanh.pop %v410
    %413 = vrot.lane.b32.xlu0 %v411, 64
    %v414 = vpop.permute.xlu0 %413
    %v416 = vmul.f32 %v395, %v414
    %v418 = vrot.slane %v416, 6
    %419 = vrot.lane.b32.xlu0 %v418, 32
    %v420 = vpop.permute.xlu0 %419
    %v421 = vsel %vm146, %v420, 0
    %423 = vmatpush.msra.mxu0 0.0
    %424 = vmatpush.msra.mxu0 0.0
    %425 = vmatpush.msra.mxu0 0.0
    %426 = vmatpush.msra.mxu0 0.0
    %427 = vmatpush.msra.mxu0 0.0
    %428 = vmatpush.msra.mxu0 0.0
    %429 = vmatpush.msra.mxu0 0.0
    %430 = vmatpush.msra.mxu0 0.0
    %431 = vmatpush.msra.mxu0 0.0
    %432 = vmatpush.msra.mxu0 0.0
    %433 = vmatpush.msra.mxu0 0.0
    %434 = vmatpush.msra.mxu0 0.0
    %435 = vmatpush.msra.mxu0 %v145
    %436 = vmatpush.msra.mxu0 %v144
    %437 = vmatpush.msra.mxu0 %v143
    %438 = vmatpush.msra.mxu0 %v142
    %439 = vmatmul.f32.gmra.mxu0 %v421
    %v440 = vpop.f32.mrf.mxu0
    %v441 = vadd.f32 0.0, %v440
    %442 = vdwg.mxu0
    %v443 = vadd.f32 %v140, %v441
    %v444 = vxor.u32 %v443, 2147483648
    %v445 = vmul.f32 %v444, 1.442695
    %v446 = vpow.pop %v445
    %v447 = vadd.f32 %v446, 1.0
    %v448 = vrcp.pop %v447
    %v449 = vmul.f32 %v447, %v448
    %v450 = vsub.f32 1.0, %v449
    %v451 = vmul.f32 %v448, %v450
    %v452 = vadd.f32 %v448, %v451
    %vm453 = vweird.f32 %v447
    %vm454 = vweird.f32 %v448
    %vm455 = vmor %vm453, %vm454
    %v456 = vsel %vm455, %v448, %v452
    %v457 = vand.u32 2147483647, %v447
    %vm458 = vcmp.eq.f32.partialorder %v457, 8.507059e+37
    %v459 = vand.u32 %v447, 2147483648
    %v460 = vor.u32 1.1754944e-38, %v459
    %v461 = vsel %vm458, %v460, %v456
    %v462 = vmul.f32 1.0, %v461
    %v463 = vtanh.pop %v443
    %v465 = vrot.slane %v410, 6
    %v467 = vmul.f32 %v462, %v465
    %469 = vrot.lane.b32.xlu0 %v463, 64
    %v470 = vpop.permute.xlu0 %469
    %v472 = vmul.f32 %v462, %v470
    %474 = vrot.lane.b32.xlu0 %v472, 32
    %v475 = vpop.permute.xlu0 %474
    %v477 = vadd.f32 %v467, %v475
    %v478 = vtanh.pop %v477
    %480 = vrot.lane.b32.xlu0 %v478, 64
    %v481 = vpop.permute.xlu0 %480
    %v483 = vmul.f32 %v462, %v481
    %485 = vrot.lane.b32.xlu0 %v483, 32
    %v486 = vpop.permute.xlu0 %485
    %v487 = vsel %vm146, %v486, 0
    %489 = vmatpush.msra.mxu0 0.0
    %490 = vmatpush.msra.mxu0 0.0
    %491 = vmatpush.msra.mxu0 0.0
    %492 = vmatpush.msra.mxu0 0.0
    %493 = vmatpush.msra.mxu0 0.0
    %494 = vmatpush.msra.mxu0 0.0
    %495 = vmatpush.msra.mxu0 0.0
    %496 = vmatpush.msra.mxu0 0.0
    %497 = vmatpush.msra.mxu0 0.0
    %498 = vmatpush.msra.mxu0 0.0
    %499 = vmatpush.msra.mxu0 0.0
    %500 = vmatpush.msra.mxu0 0.0
    %501 = vmatpush.msra.mxu0 %v145
    %502 = vmatpush.msra.mxu0 %v144
    %503 = vmatpush.msra.mxu0 %v143
    %504 = vmatpush.msra.mxu0 %v142
    %505 = vmatmul.f32.gmra.mxu0 %v487
    %v506 = vpop.f32.mrf.mxu0
    %v507 = vadd.f32 0.0, %v506
    %508 = vdwg.mxu0
    %v510 = vrot.slane %v507, 6
    %v512 = vadd.f32 %v140, %v510
    %v513 = vxor.u32 %v512, 2147483648
    %v514 = vmul.f32 %v513, 1.442695
    %v515 = vpow.pop %v514
    %v516 = vadd.f32 %v515, 1.0
    %v517 = vrcp.pop %v516
    %v518 = vmul.f32 %v516, %v517
    %v519 = vsub.f32 1.0, %v518
    %v520 = vmul.f32 %v517, %v519
    %v521 = vadd.f32 %v517, %v520
    %vm522 = vweird.f32 %v516
    %vm523 = vweird.f32 %v517
    %vm524 = vmor %vm522, %vm523
    %v525 = vsel %vm524, %v517, %v521
    %v526 = vand.u32 2147483647, %v516
    %vm527 = vcmp.eq.f32.partialorder %v526, 8.507059e+37
    %v528 = vand.u32 %v516, 2147483648
    %v529 = vor.u32 1.1754944e-38, %v528
    %v530 = vsel %vm527, %v529, %v525
    %v531 = vmul.f32 1.0, %v530
    %v532 = vtanh.pop %v512
    %v534 = vrot.slane %v477, 6
    %v536 = vmul.f32 %v531, %v534
    %538 = vrot.lane.b32.xlu0 %v532, 64
    %v539 = vpop.permute.xlu0 %538
    %v541 = vmul.f32 %v531, %v539
    %543 = vrot.lane.b32.xlu0 %v541, 32
    %v544 = vpop.permute.xlu0 %543
    %v546 = vadd.f32 %v536, %v544
    %v547 = vtanh.pop %v546
    %549 = vrot.lane.b32.xlu0 %v547, 64
    %v550 = vpop.permute.xlu0 %549
    %v552 = vmul.f32 %v531, %v550
    %v554 = vrot.slane %v552, 2
    %555 = vrot.lane.b32.xlu0 %v554, 32
    %v556 = vpop.permute.xlu0 %555
    %v557 = vsel %vm146, %v556, 0
    %559 = vmatpush.msra.mxu0 0.0
    %560 = vmatpush.msra.mxu0 0.0
    %561 = vmatpush.msra.mxu0 0.0
    %562 = vmatpush.msra.mxu0 0.0
    %563 = vmatpush.msra.mxu0 0.0
    %564 = vmatpush.msra.mxu0 0.0
    %565 = vmatpush.msra.mxu0 0.0
    %566 = vmatpush.msra.mxu0 0.0
    %567 = vmatpush.msra.mxu0 0.0
    %568 = vmatpush.msra.mxu0 0.0
    %569 = vmatpush.msra.mxu0 0.0
    %570 = vmatpush.msra.mxu0 0.0
    %571 = vmatpush.msra.mxu0 %v145
    %572 = vmatpush.msra.mxu0 %v144
    %573 = vmatpush.msra.mxu0 %v143
    %574 = vmatpush.msra.mxu0 %v142
    %575 = vmatmul.f32.gmra.mxu0 %v557
    %v576 = vpop.f32.mrf.mxu0
    %v577 = vadd.f32 0.0, %v576
    %578 = vdwg.mxu0
    %v580 = vrot.slane %v577, 4
    %v582 = vadd.f32 %v140, %v580
    %v583 = vxor.u32 %v582, 2147483648
    %v584 = vmul.f32 %v583, 1.442695
    %v585 = vpow.pop %v584
    %v586 = vadd.f32 %v585, 1.0
    %v587 = vrcp.pop %v586
    %v588 = vmul.f32 %v586, %v587
    %v589 = vsub.f32 1.0, %v588
    %v590 = vmul.f32 %v587, %v589
    %v591 = vadd.f32 %v587, %v590
    %vm592 = vweird.f32 %v586
    %vm593 = vweird.f32 %v587
    %vm594 = vmor %vm592, %vm593
    %v595 = vsel %vm594, %v587, %v591
    %v596 = vand.u32 2147483647, %v586
    %vm597 = vcmp.eq.f32.partialorder %v596, 8.507059e+37
    %v598 = vand.u32 %v586, 2147483648
    %v599 = vor.u32 1.1754944e-38, %v598
    %v600 = vsel %vm597, %v599, %v595
    %v601 = vmul.f32 1.0, %v600
    %v602 = vtanh.pop %v582
    %v604 = vrot.slane %v546, 6
    %v606 = vmul.f32 %v601, %v604
    %608 = vrot.lane.b32.xlu0 %v602, 64
    %v609 = vpop.permute.xlu0 %608
    %v611 = vmul.f32 %v601, %v609
    %613 = vrot.lane.b32.xlu0 %v611, 32
    %v614 = vpop.permute.xlu0 %613
    %v616 = vadd.f32 %v606, %v614
    %v617 = vtanh.pop %v616
    %619 = vrot.lane.b32.xlu0 %v617, 64
    %v620 = vpop.permute.xlu0 %619
    %v622 = vmul.f32 %v601, %v620
    %v624 = vrot.slane %v622, 4
    %625 = vrot.lane.b32.xlu0 %v624, 32
    %v626 = vpop.permute.xlu0 %625
    %v627 = vsel %vm146, %v626, 0
    %629 = vmatpush.msra.mxu0 0.0
    %630 = vmatpush.msra.mxu0 0.0
    %631 = vmatpush.msra.mxu0 0.0
    %632 = vmatpush.msra.mxu0 0.0
    %633 = vmatpush.msra.mxu0 0.0
    %634 = vmatpush.msra.mxu0 0.0
    %635 = vmatpush.msra.mxu0 0.0
    %636 = vmatpush.msra.mxu0 0.0
    %637 = vmatpush.msra.mxu0 0.0
    %638 = vmatpush.msra.mxu0 0.0
    %639 = vmatpush.msra.mxu0 0.0
    %640 = vmatpush.msra.mxu0 0.0
    %641 = vmatpush.msra.mxu0 %v145
    %642 = vmatpush.msra.mxu0 %v144
    %643 = vmatpush.msra.mxu0 %v143
    %644 = vmatpush.msra.mxu0 %v142
    %645 = vmatmul.f32.gmra.mxu0 %v627
    %v646 = vpop.f32.mrf.mxu0
    %v647 = vadd.f32 0.0, %v646
    %648 = vdwg.mxu0
    %v650 = vrot.slane %v647, 2
    %v652 = vadd.f32 %v140, %v650
    %v653 = vxor.u32 %v652, 2147483648
    %v654 = vmul.f32 %v653, 1.442695
    %v655 = vpow.pop %v654
    %v656 = vadd.f32 %v655, 1.0
    %v657 = vrcp.pop %v656
    %v658 = vmul.f32 %v656, %v657
    %v659 = vsub.f32 1.0, %v658
    %v660 = vmul.f32 %v657, %v659
    %v661 = vadd.f32 %v657, %v660
    %vm662 = vweird.f32 %v656
    %vm663 = vweird.f32 %v657
    %vm664 = vmor %vm662, %vm663
    %v665 = vsel %vm664, %v657, %v661
    %v666 = vand.u32 2147483647, %v656
    %vm667 = vcmp.eq.f32.partialorder %v666, 8.507059e+37
    %v668 = vand.u32 %v656, 2147483648
    %v669 = vor.u32 1.1754944e-38, %v668
    %v670 = vsel %vm667, %v669, %v665
    %v671 = vmul.f32 1.0, %v670
    %v672 = vtanh.pop %v652
    %v674 = vrot.slane %v616, 6
    %v676 = vmul.f32 %v671, %v674
    %678 = vrot.lane.b32.xlu0 %v672, 64
    %v679 = vpop.permute.xlu0 %678
    %v681 = vmul.f32 %v671, %v679
    %683 = vrot.lane.b32.xlu0 %v681, 32
    %v684 = vpop.permute.xlu0 %683
    %v686 = vadd.f32 %v676, %v684
    %v687 = vtanh.pop %v686
    %689 = vrot.lane.b32.xlu0 %v687, 64
    %v690 = vpop.permute.xlu0 %689
    %v692 = vmul.f32 %v671, %v690
    %694 = vrot.lane.b32.xlu0 %v278, 64
    %v695 = vpop.permute.xlu0 %694
    %697 = vrot.lane.b32.xlu0 %v348, 96
    %v698 = vpop.permute.xlu0 %697
    %702 = vrot.lane.b32.xlu0 %v554, 64
    %v703 = vpop.permute.xlu0 %702
    %705 = vrot.lane.b32.xlu0 %v624, 96
    %v706 = vpop.permute.xlu0 %705
    %v709 = vrot.slane %v692, 6
    %v711 = vsel %vm146, %v210, %v695
    %vm712 = vcmask 523264
    %v713 = vsel %vm712, %v711, %v698
    %vm714 = vcmask 785408
    %v715 = vsel %vm714, %v713, %v418
    %v716 = vsel %vm146, %v486, %v703
    %v717 = vsel %vm712, %v716, %v706
    %v718 = vsel %vm714, %v717, %v709
    %v719 = vld [vmem:[#allocation10] sm:$0xff]
    %v720 = vld [vmem:[#allocation10 + $0x8] sm:$0xff]
    %v721 = vld [vmem:[#allocation10 + $0x10] sm:$0xff]
    %v722 = vld [vmem:[#allocation10 + $0x18] sm:$0xff]
    %v723 = vld [vmem:[#allocation10 + $0x20] sm:$0xff]
    %v724 = vld [vmem:[#allocation10 + $0x28] sm:$0xff]
    %v725 = vld [vmem:[#allocation10 + $0x30] sm:$0xff]
    %v726 = vld [vmem:[#allocation10 + $0x38] sm:$0xff]
    %v727 = vld [vmem:[#allocation10 + $0x40] sm:$0xff]
    %v728 = vld [vmem:[#allocation10 + $0x48] sm:$0xff]
    %v729 = vld [vmem:[#allocation10 + $0x50] sm:$0xff]
    %v730 = vld [vmem:[#allocation10 + $0x58] sm:$0xff]
    %v731 = vld [vmem:[#allocation10 + $0x60] sm:$0xff]
    %v732 = vld [vmem:[#allocation10 + $0x68] sm:$0xff]
    %v733 = vld [vmem:[#allocation10 + $0x70] sm:$0xff]
    %v734 = vld [vmem:[#allocation10 + $0x78] sm:$0xff]
    %v735 = vld [vmem:[#allocation10 + $0x80] sm:$0xff]
    %v736 = vld [vmem:[#allocation10 + $0x88] sm:$0xff]
    %v737 = vld [vmem:[#allocation10 + $0x90] sm:$0xff]
    %v738 = vld [vmem:[#allocation10 + $0x98] sm:$0xff]
    %v739 = vld [vmem:[#allocation10 + $0xa0] sm:$0xff]
    %v740 = vld [vmem:[#allocation10 + $0xa8] sm:$0xff]
    %v741 = vld [vmem:[#allocation10 + $0xb0] sm:$0xff]
    %v742 = vld [vmem:[#allocation10 + $0xb8] sm:$0xff]
    %v743 = vld [vmem:[#allocation10 + $0xc0] sm:$0xff]
    %v744 = vld [vmem:[#allocation10 + $0xc8] sm:$0xff]
    %v745 = vld [vmem:[#allocation10 + $0xd0] sm:$0xff]
    %v746 = vld [vmem:[#allocation10 + $0xd8] sm:$0xff]
    %v747 = vld [vmem:[#allocation10 + $0xe0] sm:$0xff]
    %v748 = vld [vmem:[#allocation10 + $0xe8] sm:$0xff]
    %v749 = vld [vmem:[#allocation10 + $0xf0] sm:$0xff]
    %v750 = vld [vmem:[#allocation10 + $0xf8] sm:$0xff]
    %v751 = vld [vmem:[%s5] sm:$0x1]
    %v753 = vperm.slane %v751, 0
    %755 = vmatpush.msra.mxu0 %v734
    %756 = vmatpush.msra.mxu0 %v733
    %757 = vmatpush.msra.mxu0 %v732
    %758 = vmatpush.msra.mxu0 %v731
    %759 = vmatpush.msra.mxu0 %v730
    %760 = vmatpush.msra.mxu0 %v729
    %761 = vmatpush.msra.mxu0 %v728
    %762 = vmatpush.msra.mxu0 %v727
    %763 = vmatpush.msra.mxu0 %v726
    %764 = vmatpush.msra.mxu0 %v725
    %765 = vmatpush.msra.mxu0 %v724
    %766 = vmatpush.msra.mxu0 %v723
    %767 = vmatpush.msra.mxu0 %v722
    %768 = vmatpush.msra.mxu0 %v721
    %769 = vmatpush.msra.mxu0 %v720
    %770 = vmatpush.msra.mxu0 %v719
    %771 = vmatmul.f32.gmra.mxu0 %v715
    %v772 = vpop.f32.mrf.mxu0
    %v773 = vadd.f32 %v753, %v772
    %774 = vdwg.mxu0
    %775 = vmatpush.msra.mxu0 %v750
    %776 = vmatpush.msra.mxu0 %v749
    %777 = vmatpush.msra.mxu0 %v748
    %778 = vmatpush.msra.mxu0 %v747
    %779 = vmatpush.msra.mxu0 %v746
    %780 = vmatpush.msra.mxu0 %v745
    %781 = vmatpush.msra.mxu0 %v744
    %782 = vmatpush.msra.mxu0 %v743
    %783 = vmatpush.msra.mxu0 %v742
    %784 = vmatpush.msra.mxu0 %v741
    %785 = vmatpush.msra.mxu0 %v740
    %786 = vmatpush.msra.mxu0 %v739
    %787 = vmatpush.msra.mxu0 %v738
    %788 = vmatpush.msra.mxu0 %v737
    %789 = vmatpush.msra.mxu0 %v736
    %790 = vmatpush.msra.mxu0 %v735
    %791 = vmatmul.f32.gmra.mxu0 %v718
    %v792 = vpop.f32.mrf.mxu0
    %v793 = vadd.f32 %v773, %v792
    %794 = vdwg.mxu0
    %795 = vst [vmem:[#allocation11] sm:$0x3] %v793
    // Predicated region
    $region46: #{tpu_custom_call.1} parent=1 // pred_check
      _
    $region47: #{tpu_custom_call.1} parent=1 // pred_check_branch
      %797 = sbr.rel (0) target = $region49
    $region48: #{tpu_custom_call.1} parent=1 // pred_region
      %799 = vsyncadd [#allocation4], 0
      %s801 = sshll.u32 [#allocation11], 4
      %s802 = int_to_ptr.vmem [resolvable:$true] %s801
      %s803 = sshll.u32 %s6, 4
      %s804 = int_to_ptr.hbm [resolvable:$true] %s803
      %806 = dma.vmem_to_hbm [thread:$0]  %s802, 32, %s804, [#allocation4]
    $region49: #{tpu_custom_call.1} parent=1 // pred_fallthru
      _
    // Predicated region
    $region50: #{tpu_custom_call.1} parent=1 // pred_check
      _
    $region51: #{tpu_custom_call.1} parent=1 // pred_check_branch
      %808 = sbr.rel (0) target = $region53
    $region52: #{tpu_custom_call.1} parent=1 // pred_region
      %810 = dma.done [#allocation4], 32
    $region53: #{tpu_custom_call.1} parent=1 // pred_fallthru
      _
    %811 = vsyncpa [#allocation3], 1
    %812 = vsyncpa [#allocation6], 1
    %813 = vsyncpa [#allocation9], 1
    %814 = vsyncpa [#allocation4], 1

</llo_original>
